<compile_context>
chip_gen: v5e
topology: v5e:2x2
jax: 0.10.0
libtpu: 0.0.40
codegen_flags: <defaults>
</compile_context>

<pallas_src>
import functools

import jax
import jax.numpy as jnp
from jax import lax
from jax.experimental import pallas as pl
from jax.experimental.pallas import tpu as pltpu

EPS = 1e-5  # nn.BatchNorm2d default


# --------------------------------------------------------------------------- #
# Tiling / VMEM planning helpers
# --------------------------------------------------------------------------- #
def _tpu_generation():
    try:
        kind = jax.devices()[0].device_kind.lower()
    except Exception:
        return "unknown"
    if "v5 lite" in kind or "v5lite" in kind or "v5e" in kind:
        return "v5e"
    if "v6" in kind:
        return "v6e"
    if "v7" in kind or "7x" in kind:
        return "v7x"
    return "unknown"


def _vmem_plan():
    """Per-generation byte budgets: x-block size, scoped-VMEM limit, megacore."""
    gen = _tpu_generation()
    if gen == "v7x":   # 64 MiB physical VMEM, ~3.2 TB/s HBM, 2 TensorCores
        return dict(gen=gen, block_budget=7 << 20, vmem_limit=48 << 20, min_c_tiles=2)
    if gen == "v6e":   # 128 MiB physical VMEM, ~1.4 TB/s HBM, 1 TC
        return dict(gen=gen, block_budget=8 << 20, vmem_limit=64 << 20, min_c_tiles=1)
    if gen == "v5e":   # 128 MiB physical VMEM, ~0.82 TB/s HBM, 1 TC
        return dict(gen=gen, block_budget=4 << 20, vmem_limit=48 << 20, min_c_tiles=1)
    # Unknown / older generation: conservative defaults, keep compiler's VMEM limit.
    return dict(gen=gen, block_budget=2 << 20, vmem_limit=None, min_c_tiles=1)


def _usable_vmem(plan):
    limit = plan["vmem_limit"]
    if limit is None:
        limit = 16 << 20  # conservative default scoped VMEM
    return int(limit * 0.85)


def _sublane_align(dtype):
    # Sub-32-bit dtypes pack along sublanes: min tile height 8 (f32) / 16 (bf16) / 32 (int8).
    bits = jnp.dtype(dtype).itemsize * 8
    return max(8, 256 // max(bits, 1))


def _aligned_divisor(dim, align, max_val):
    """Largest t <= max_val with dim % t == 0 and t % align == 0; falls back to the
    full dim (always a legal TPU block shape)."""
    if dim <= max_val:
        return dim
    t = (max_val // align) * align
    while t >= align:
        if dim % t == 0:
            return t
        t -= align
    return dim


def _largest_divisor(n, max_val):
    d = max(1, min(n, max_val))
    while d > 1 and n % d:
        d -= 1
    return d


def _fused_channel_tile(N, C, HW, itemsize, plan, c_align):
    """c_t for the fused single-read path, or None if it does not fit VMEM.

    Footprint per channel: 2x input block + 2x output block (double buffered)
    + ~3 slab-sized fp32 temporaries inside the kernel body.
    """
    per_c = N * HW * (4 * itemsize + 3 * 4)
    budget = _usable_vmem(plan)
    max_ct = budget // per_c
    if max_ct < 1:
        return None
    if plan["min_c_tiles"] > 1 and C >= plan["min_c_tiles"] * c_align:
        max_ct = min(max_ct, C // plan["min_c_tiles"])  # keep v7x's 2nd TC busy
    c_t = _aligned_divisor(C, c_align, max_ct)
    if c_t * per_c > budget:
        return None
    return c_t


def _two_pass_tiles(N, C, HW, itemsize, plan, c_align):
    """Byte-budgeted (n_t, c_t, hw_t) block: lane-dense hw_t first, then c_t, then n_t."""
    budget = plan["block_budget"]
    hw_max = max(128, budget // (itemsize * c_align))
    hw_t = _aligned_divisor(HW, 128, hw_max)
    c_max = max(1, budget // (itemsize * hw_t))
    if plan["min_c_tiles"] > 1 and C >= plan["min_c_tiles"] * c_align:
        c_max = min(c_max, C // plan["min_c_tiles"])    # >= 2 channel tiles on v7x
    c_t = _aligned_divisor(C, c_align, c_max)
    n_max = max(1, budget // (itemsize * hw_t * c_t))
    n_t = _largest_divisor(N, n_max)
    return n_t, c_t, hw_t


# --------------------------------------------------------------------------- #
# Kernels
# --------------------------------------------------------------------------- #
def _stats_kernel(x_ref, gamma_ref, beta_ref, scale_ref, shift_ref,
                  sum_acc, sq_acc, *, inv_m):
    # x_ref: (n_t, c_t, hw_t); gamma/beta/scale/shift: (c_t, 1) fp32.
    # sum_acc / sq_acc: (c_t, 1) fp32 VMEM scratch, resident across reduction axes.
    num_h = pl.num_programs(2)
    step = pl.program_id(1) * num_h + pl.program_id(2)      # linearized (n, hw) step
    last = pl.num_programs(1) * num_h - 1

    @pl.when(step == 0)
    def _init():
        sum_acc[...] = jnp.zeros_like(sum_acc)
        sq_acc[...] = jnp.zeros_like(sq_acc)

    x = x_ref[...].astype(jnp.float32)                      # (n_t, c_t, hw_t)
    # Per-vreg VPU adds across n_t and the hw_t/128 vreg columns, then a single
    # cross-lane (XLU) reduce per tile — hidden under the block DMA (HBM-bound).
    sum_acc[...] += jnp.sum(x.sum(axis=0), axis=-1, keepdims=True)
    sq_acc[...] += jnp.sum((x * x).sum(axis=0), axis=-1, keepdims=True)

    @pl.when(step == last)
    def _finalize():
        mean = sum_acc[...] * inv_m
        var = jnp.maximum(sq_acc[...] * inv_m - mean * mean, 0.0)   # biased, fp32
        scale = gamma_ref[...] * lax.rsqrt(var + EPS)
        scale_ref[...] = scale
        shift_ref[...] = beta_ref[...] - mean * scale


def _apply_kernel(x_ref, scale_ref, shift_ref, o_ref):
    # y = x * scale + shift (per-channel scale/shift broadcast along N and lanes).
    x = x_ref[...].astype(jnp.float32)                      # (n_t, c_t, hw_t)
    y = x * scale_ref[...][None] + shift_ref[...][None]
    o_ref[...] = y.astype(o_ref.dtype)


def _fused_kernel(x_ref, gamma_ref, beta_ref, o_ref, *, inv_m):
    # Whole (N, c_t, HW) channel slab resident: single read + single write of x.
    x = x_ref[...].astype(jnp.float32)
    s = jnp.sum(x.sum(axis=0), axis=-1, keepdims=True)      # (c_t, 1)
    q = jnp.sum((x * x).sum(axis=0), axis=-1, keepdims=True)
    mean = s * inv_m
    var = jnp.maximum(q * inv_m - mean * mean, 0.0)
    scale = gamma_ref[...] * lax.rsqrt(var + EPS)
    shift = beta_ref[...] - mean * scale
    o_ref[...] = (x * scale[None] + shift[None]).astype(o_ref.dtype)


# --------------------------------------------------------------------------- #
# Wrapper
# --------------------------------------------------------------------------- #
def afrm_bn_forward(x, weights, biases, task_id=0, force_two_pass=False):
    """Forward pass of afrm_BN: BatchNorm2d (training-mode batch statistics) with
    the selected task's (gamma, beta).

    x:       (N, C, H, W) NCHW, as in the PyTorch module.
    weights: (num_tasks, C) per-task BN gamma
    biases:  (num_tasks, C) per-task BN beta
    """
    N, C, H, W = x.shape
    HW = H * W
    M = N * HW
    inv_m = 1.0 / M
    itemsize = jnp.dtype(x.dtype).itemsize
    c_align = _sublane_align(x.dtype)
    plan = _vmem_plan()

    gamma = weights[task_id].astype(jnp.float32).reshape(C, 1)
    beta = biases[task_id].astype(jnp.float32).reshape(C, 1)

    # Free view of NCHW: (N, C, H*W). No transpose, no extra HBM round-trips.
    x3 = x.reshape(N, C, HW)

    cp_kwargs = {}
    if plan["vmem_limit"] is not None:
        cp_kwargs["vmem_limit_bytes"] = plan["vmem_limit"]

    fused_ct = None if force_two_pass else _fused_channel_tile(
        N, C, HW, itemsize, plan, c_align)

    # ---- fused single-read path: stats + apply in one call (1 read + 1 write) ----
    if fused_ct is not None:
        c_t = fused_ct
        x_spec = pl.BlockSpec((N, c_t, HW), lambda c: (0, c, 0))
        vec_spec = pl.BlockSpec((c_t, 1), lambda c: (c, 0))
        fused_cost = pl.CostEstimate(
            flops=int(5 * x3.size), transcendentals=int(C),
            bytes_accessed=int(2 * x3.size * itemsize + 2 * C * 4))
        out3 = pl.pallas_call(
            functools.partial(_fused_kernel, inv_m=inv_m),
            out_shape=jax.ShapeDtypeStruct((N, C, HW), x.dtype),
            grid=(C // c_t,),
            in_specs=[x_spec, vec_spec, vec_spec],
            out_specs=x_spec,
            compiler_params=pltpu.CompilerParams(
                dimension_semantics=("parallel",), **cp_kwargs),
            cost_estimate=fused_cost,
        )(x3, gamma, beta)
        return out3.reshape(N, C, H, W)

    # ---- two-pass fallback: stats -> (scale, shift), then y = x*scale + shift ----
    n_t, c_t, hw_t = _two_pass_tiles(N, C, HW, itemsize, plan, c_align)
    grid = (C // c_t, N // n_t, HW // hw_t)
    x_spec = pl.BlockSpec((n_t, c_t, hw_t), lambda c, n, h: (n, c, h))
    vec_spec = pl.BlockSpec((c_t, 1), lambda c, n, h: (c, 0))

    stats_cost = pl.CostEstimate(
        flops=int(3 * x3.size), transcendentals=int(C),
        bytes_accessed=int(x3.size * itemsize + 4 * C * 4))
    scale, shift = pl.pallas_call(
        functools.partial(_stats_kernel, inv_m=inv_m),
        out_shape=(jax.ShapeDtypeStruct((C, 1), jnp.float32),
                   jax.ShapeDtypeStruct((C, 1), jnp.float32)),
        grid=grid,
        in_specs=[x_spec, vec_spec, vec_spec],
        out_specs=[vec_spec, vec_spec],
        scratch_shapes=[pltpu.VMEM((c_t, 1), jnp.float32),
                        pltpu.VMEM((c_t, 1), jnp.float32)],
        compiler_params=pltpu.CompilerParams(
            dimension_semantics=("parallel", "arbitrary", "arbitrary"), **cp_kwargs),
        cost_estimate=stats_cost,
    )(x3, gamma, beta)

    apply_cost = pl.CostEstimate(
        flops=int(2 * x3.size), transcendentals=0,
        bytes_accessed=int(2 * x3.size * itemsize + 2 * C * 4))
    out3 = pl.pallas_call(
        _apply_kernel,
        out_shape=jax.ShapeDtypeStruct((N, C, HW), x.dtype),
        grid=grid,
        in_specs=[x_spec, vec_spec, vec_spec],
        out_specs=x_spec,
        compiler_params=pltpu.CompilerParams(
            dimension_semantics=("parallel", "parallel", "parallel"), **cp_kwargs),
        cost_estimate=apply_cost,
    )(x3, scale, shift)

    return out3.reshape(N, C, H, W)


def afrm_bn_return_loss(weights, biases):
    # return_loss(): trivial parameter-side reduction — plain JAX, no kernel needed.
    weight_loss = jnp.sum((weights[0] - weights[1]) ** 2)
    bias_loss = jnp.sum((biases[0] - biases[1]) ** 2)
    return weight_loss, bias_loss


def _reference_bn(x, gamma, beta):
    # Pure-JAX reference of training-mode BatchNorm2d (NCHW).
    mean = jnp.mean(x, axis=(0, 2, 3), keepdims=True)
    var = jnp.mean((x - mean) ** 2, axis=(0, 2, 3), keepdims=True)
    g = gamma.reshape(1, -1, 1, 1)
    b = beta.reshape(1, -1, 1, 1)
    return (x - mean) * lax.rsqrt(var + EPS) * g + b


if __name__ == "__main__":
    key = jax.random.PRNGKey(0)
    k_x, k_w, k_b = jax.random.split(key, 3)
    N, C, H, W = 2, 4, 16, 16
    num_tasks = 2

    x = jax.random.normal(k_x, (N, C, H, W), dtype=jnp.float32)

    # Module __init__: nn.init.constant_(weight, 1); nn.init.constant_(bias, 0).
    weights = jnp.ones((num_tasks, C), dtype=jnp.float32)
    biases = jnp.zeros((num_tasks, C), dtype=jnp.float32)

    task_id = 0  # default self.task_id
    out = jax.block_until_ready(afrm_bn_forward(x, weights, biases, task_id=task_id))
    ref = _reference_bn(x, weights[task_id], biases[task_id])
    assert out.shape == x.shape
    assert jnp.allclose(out, ref, atol=1e-4, rtol=1e-4), "mismatch vs reference (default params)"

    # Extra coverage: non-trivial per-task gamma/beta, both code paths (fused + two-pass).
    weights2 = jax.random.normal(k_w, (num_tasks, C), dtype=jnp.float32)
    biases2 = jax.random.normal(k_b, (num_tasks, C), dtype=jnp.float32)
    ref2 = _reference_bn(x, weights2[1], biases2[1])
    out_fused = jax.block_until_ready(afrm_bn_forward(x, weights2, biases2, task_id=1))
    out_2pass = jax.block_until_ready(
        afrm_bn_forward(x, weights2, biases2, task_id=1, force_two_pass=True))
    assert jnp.allclose(out_fused, ref2, atol=1e-4, rtol=1e-4), "fused path mismatch"
    assert jnp.allclose(out_2pass, ref2, atol=1e-4, rtol=1e-4), "two-pass path mismatch"

    wl, bl = afrm_bn_return_loss(weights2, biases2)
    jax.block_until_ready((wl, bl))

    # TODO(synk): running_mean/running_var state updates (module in eval mode) are not
    # modeled; this implements the training-mode forward (batch statistics).

    print("KERNEL_OK")
</pallas_src>

<mosaic_0001>
module attributes {stable_mosaic.version = 11 : i64} {
  func.func @_fused_kernel(%arg0: i32, %arg1: memref<2x4x256xf32, #tpu.memory_space<vmem>>, %arg2: memref<4x1xf32, #tpu.memory_space<vmem>>, %arg3: memref<4x1xf32, #tpu.memory_space<vmem>>, %arg4: memref<2x4x256xf32, #tpu.memory_space<vmem>>) attributes {dimension_semantics = [#tpu.dimension_semantics<parallel>], iteration_bounds = array<i64: 1>, scalar_prefetch = 0 : i64, scratch_operands = 0 : i64, tpu.core_type = #tpu.core_type<tc>, window_params = [{transform_indices = @transform_0, window_bounds = array<i64: 2, 4, 256>}, {transform_indices = @transform_1, window_bounds = array<i64: 4, 1>}, {transform_indices = @transform_2, window_bounds = array<i64: 4, 1>}, {transform_indices = @transform_3, window_bounds = array<i64: 2, 4, 256>}]} {
    %c0 = arith.constant 0 : index
    %c0_0 = arith.constant 0 : index
    %c0_1 = arith.constant 0 : index
    %0 = vector.load %arg1[%c0, %c0_0, %c0_1] : memref<2x4x256xf32, #tpu.memory_space<vmem>>, vector<2x4x256xf32>
    %cst = arith.constant dense<0.000000e+00> : vector<4x256xf32>
    %1 = vector.multi_reduction <add>, %0, %cst [0] : vector<2x4x256xf32> to vector<4x256xf32>
    %cst_2 = arith.constant dense<0.000000e+00> : vector<4xf32>
    %2 = vector.multi_reduction <add>, %1, %cst_2 [1] : vector<4x256xf32> to vector<4xf32>
    %3 = vector.shape_cast %2 : vector<4xf32> to vector<4x1xf32>
    %4 = arith.mulf %0, %0 : vector<2x4x256xf32>
    %cst_3 = arith.constant dense<0.000000e+00> : vector<4x256xf32>
    %5 = vector.multi_reduction <add>, %4, %cst_3 [0] : vector<2x4x256xf32> to vector<4x256xf32>
    %cst_4 = arith.constant dense<0.000000e+00> : vector<4xf32>
    %6 = vector.multi_reduction <add>, %5, %cst_4 [1] : vector<4x256xf32> to vector<4xf32>
    %7 = vector.shape_cast %6 : vector<4xf32> to vector<4x1xf32>
    %cst_5 = arith.constant 0.001953125 : f32
    %8 = vector.broadcast %cst_5 : f32 to vector<4x1xf32>
    %9 = arith.mulf %3, %8 : vector<4x1xf32>
    %cst_6 = arith.constant 0.001953125 : f32
    %10 = vector.broadcast %cst_6 : f32 to vector<4x1xf32>
    %11 = arith.mulf %7, %10 : vector<4x1xf32>
    %12 = arith.mulf %9, %9 : vector<4x1xf32>
    %13 = arith.subf %11, %12 : vector<4x1xf32>
    %cst_7 = arith.constant 0.000000e+00 : f32
    %14 = vector.broadcast %cst_7 : f32 to vector<4x1xf32>
    %15 = arith.maximumf %13, %14 : vector<4x1xf32>
    %c0_8 = arith.constant 0 : index
    %c0_9 = arith.constant 0 : index
    %16 = vector.load %arg2[%c0_8, %c0_9] : memref<4x1xf32, #tpu.memory_space<vmem>>, vector<4x1xf32>
    %cst_10 = arith.constant 9.99999974E-6 : f32
    %17 = vector.broadcast %cst_10 : f32 to vector<4x1xf32>
    %18 = arith.addf %15, %17 : vector<4x1xf32>
    %19 = math.rsqrt %18 : vector<4x1xf32>
    %20 = arith.mulf %16, %19 : vector<4x1xf32>
    %c0_11 = arith.constant 0 : index
    %c0_12 = arith.constant 0 : index
    %21 = vector.load %arg3[%c0_11, %c0_12] : memref<4x1xf32, #tpu.memory_space<vmem>>, vector<4x1xf32>
    %22 = arith.mulf %9, %20 : vector<4x1xf32>
    %23 = arith.subf %21, %22 : vector<4x1xf32>
    %24 = vector.shape_cast %20 : vector<4x1xf32> to vector<1x4x1xf32>
    %25 = vector.broadcast %24 : vector<1x4x1xf32> to vector<2x4x256xf32>
    %26 = arith.mulf %0, %25 : vector<2x4x256xf32>
    %27 = vector.shape_cast %23 : vector<4x1xf32> to vector<1x4x1xf32>
    %28 = vector.broadcast %27 : vector<1x4x1xf32> to vector<2x4x256xf32>
    %29 = arith.addf %26, %28 : vector<2x4x256xf32>
    %c0_13 = arith.constant 0 : index
    %c0_14 = arith.constant 0 : index
    %c0_15 = arith.constant 0 : index
    %30 = vector.load %arg4[%c0_13, %c0_14, %c0_15] : memref<2x4x256xf32, #tpu.memory_space<vmem>>, vector<2x4x256xf32>
    tpu.vector_store %arg4[%c0_13, %c0_14, %c0_15], %29 {strides = array<i32>} : memref<2x4x256xf32, #tpu.memory_space<vmem>>, vector<2x4x256xf32>,
    return
  }
  func.func @transform_0(%arg0: i32) -> (i32, i32, i32) {
    %c0_i32 = arith.constant 0 : i32
    %c0_i32_0 = arith.constant 0 : i32
    %c0_i32_1 = arith.constant 0 : i32
    return %c0_i32, %arg0, %c0_i32_0 : i32, i32, i32
  }
  func.func @transform_1(%arg0: i32) -> (i32, i32) {
    %c0_i32 = arith.constant 0 : i32
    %c0_i32_0 = arith.constant 0 : i32
    return %arg0, %c0_i32 : i32, i32
  }
  func.func @transform_2(%arg0: i32) -> (i32, i32) {
    %c0_i32 = arith.constant 0 : i32
    %c0_i32_0 = arith.constant 0 : i32
    return %arg0, %c0_i32 : i32, i32
  }
  func.func @transform_3(%arg0: i32) -> (i32, i32, i32) {
    %c0_i32 = arith.constant 0 : i32
    %c0_i32_0 = arith.constant 0 : i32
    %c0_i32_1 = arith.constant 0 : i32
    return %c0_i32, %arg0, %c0_i32_0 : i32, i32, i32
  }
}

</mosaic_0001>

<llo_original>
// kernel: tpu_custom_call.1
$region0: #{tpu_custom_call.1}
  #allocation0 [shape = 'u32[]', space=smem, size = 0x4, offset = 0x4, fixed_abs, tag = 'smem constant byte address 0x4 - core index']
  #allocation1 [shape = 'u32[72,128]{1,0:T(1,128)}', space=vmem, size = 0x9000, scoped, tag = 'internal scratch']
  %s0 = inlined_call_operand.hbm [shape: f32[2,4,256], index: 0, kind: input, shape index: {}]
  %s1 = inlined_call_operand.vmem [shape: f32[4,1], index: 1, kind: input, shape index: {}]
  %s2 = inlined_call_operand.vmem [shape: f32[4,1], index: 2, kind: input, shape index: {}]
  %s3 = inlined_call_operand.hbm [shape: f32[2,4,256], index: 3, kind: output, shape index: {}]
  %s4 = sld [smem:[#allocation0]]
  $region26: #{tpu_custom_call.1} parent=0
    _
  %s6 = ssub.s32 1, %s4
  %s7 = scalar_select 0, %s6, %s4
  $region1: #{tpu_custom_call.1} parent=0
    #allocation2 [shape = 'u8[8192]{0}', space=vmem, size = 0x2000, scoped, tag = 'input window, operand 0, single buffered']
    #allocation3 [shape = 's32[1]{0}', space=sflag, size = 0x4, scoped, tag = 'scoped memory for tpu_custom_call.1']
    #allocation4 [shape = 's32[1]{0}', space=sflag, size = 0x4, scoped, tag = 'scoped memory for tpu_custom_call.1']
    #allocation5 [shape = 'u8[8192]{0}', space=vmem, size = 0x2000, scoped, tag = 'output window, operand 0, single buffered']
    %8 = vsyncpa [#allocation3], 0
    %9 = vsyncpa [#allocation4], 0
    // Predicated region
    $region2: #{tpu_custom_call.1} parent=1 // pred_check
      _
    $region3: #{tpu_custom_call.1} parent=1 // pred_check_branch
      %11 = sbr.rel (0) target = $region5
    $region4: #{tpu_custom_call.1} parent=1 // pred_region
      %13 = vsyncadd [#allocation3], 0
      %s14 = sshll.u32 %s0, 4
      %s15 = int_to_ptr.hbm [resolvable:$true] %s14
      %s16 = sshll.u32 [#allocation2], 4
      %s17 = int_to_ptr.vmem [resolvable:$true] %s16
      %22 = dma.hbm_to_vmem [thread:$0]  %s15, 256, %s17, [#allocation3], 128, 128, 8
    $region5: #{tpu_custom_call.1} parent=1 // pred_fallthru
      _
    // Predicated region
    $region6: #{tpu_custom_call.1} parent=1 // pred_check
      _
    $region7: #{tpu_custom_call.1} parent=1 // pred_check_branch
      %24 = sbr.rel (0) target = $region9
    $region8: #{tpu_custom_call.1} parent=1 // pred_region
      _
    $region9: #{tpu_custom_call.1} parent=1 // pred_fallthru
      _
    // Predicated region
    $region10: #{tpu_custom_call.1} parent=1 // pred_check
      _
    $region11: #{tpu_custom_call.1} parent=1 // pred_check_branch
      %26 = sbr.rel (0) target = $region13
    $region12: #{tpu_custom_call.1} parent=1 // pred_region
      _
    $region13: #{tpu_custom_call.1} parent=1 // pred_fallthru
      _
    // Predicated region
    $region14: #{tpu_custom_call.1} parent=1 // pred_check
      _
    $region15: #{tpu_custom_call.1} parent=1 // pred_check_branch
      %28 = sbr.rel (0) target = $region17
    $region16: #{tpu_custom_call.1} parent=1 // pred_region
      %30 = dma.done [#allocation3], 256
    $region17: #{tpu_custom_call.1} parent=1 // pred_fallthru
      _
    %v31 = vld [vmem:[#allocation2] sm:$0xff]
    %v32 = vld [vmem:[#allocation2 + $0x8] sm:$0xff]
    %35 = vst [vmem:[#allocation1] ss:$2 sm:$0xff] %v31
    %v36 = vld.sshfl [vmem:[#allocation1] sm:$0xff pattern:$0x75316420]
    %v37 = vld.sshfl [vmem:[#allocation1 + $0x8] sm:$0xff pattern:$0x75316420]
    %s38 = scalar_lea.vmem [#allocation1], 16
    %39 = vst [vmem:[%s38] ss:$2 sm:$0xff] %v32
    %v40 = vld.sshfl [vmem:[#allocation1 + $0x10] sm:$0xff pattern:$0x75316420]
    %v41 = vld.sshfl [vmem:[#allocation1 + $0x18] sm:$0xff pattern:$0x75316420]
    %vm46 = vcmask 1043456
    %v47 = vsel %vm46, %v36, 0.0
    %v48 = vsel %vm46, %v40, 0.0
    %v49 = vadd.f32 %v47, %v48
    %v50 = vsel %vm46, %v37, 0.0
    %v51 = vsel %vm46, %v41, 0.0
    %v52 = vadd.f32 %v50, %v51
    %v53 = vsel %vm46, %v49, 0.0
    %v54 = vsel %vm46, %v52, 0.0
    %v55 = vadd.f32 %v53, %v54
    %56 = vadd.xlane.f32.xlu0 %v55
    %v57 = vpop.xlane.xlu0 %56
    %v58 = vmul.f32 %v31, %v31
    %v59 = vmul.f32 %v32, %v32
    %62 = vst [vmem:[#allocation1] ss:$2 sm:$0xff] %v58
    %v63 = vld.sshfl [vmem:[#allocation1] sm:$0xff pattern:$0x75316420]
    %v64 = vld.sshfl [vmem:[#allocation1 + $0x8] sm:$0xff pattern:$0x75316420]
    %s65 = scalar_lea.vmem [#allocation1], 16
    %66 = vst [vmem:[%s65] ss:$2 sm:$0xff] %v59
    %v67 = vld.sshfl [vmem:[#allocation1 + $0x10] sm:$0xff pattern:$0x75316420]
    %v68 = vld.sshfl [vmem:[#allocation1 + $0x18] sm:$0xff pattern:$0x75316420]
    %v73 = vsel %vm46, %v63, 0.0
    %v74 = vsel %vm46, %v67, 0.0
    %v75 = vadd.f32 %v73, %v74
    %v76 = vsel %vm46, %v64, 0.0
    %v77 = vsel %vm46, %v68, 0.0
    %v78 = vadd.f32 %v76, %v77
    %v79 = vsel %vm46, %v75, 0.0
    %v80 = vsel %vm46, %v78, 0.0
    %v81 = vadd.f32 %v79, %v80
    %82 = vadd.xlane.f32.xlu0 %v81
    %v83 = vpop.xlane.xlu0 %82
    %v84 = vmul.f32 %v57, 0.001953125
    %v85 = vmul.f32 %v83, 0.001953125
    %v86 = vmul.f32 %v84, %v84
    %v87 = vsub.f32 %v85, %v86
    %v88 = vmax.f32 %v87, 0.0
    %v89 = vld [vmem:[%s1] sm:$0xf]
    %v90 = vadd.f32 %v88, 1e-05
    %v91 = vrsqrt.pop %v90
    %v92 = vmul.f32 %v91, %v90
    %v93 = vmul.f32 %v92, %v91
    %v94 = vmul.f32 0.5, %v93
    %v95 = vsub.f32 1.5, %v94
    %v96 = vmul.f32 %v91, %v95
    %vm97 = vweird.f32 %v90
    %vm98 = vweird.f32 %v91
    %vm99 = vmor %vm97, %vm98
    %v100 = vsel %vm99, %v91, %v96
    %v101 = vmul.f32 %v89, %v100
    %v102 = vld [vmem:[%s2] sm:$0xf]
    %v103 = vmul.f32 %v84, %v101
    %v104 = vsub.f32 %v102, %v103
    %106 = vset.pattern.permute.xlu0 0
    %107 = vperm.xlu0 %106, %v101
    %v108 = vpop.permute.xlu0 %107
    %v110 = vunpack.c.l.s4 839922192
    %v111 = vunpack.c.0.s8 %v110
    %v112 = vperm.slane %v108, %v111
    %v114 = vmul.f32 %v31, %v112
    %v115 = vmul.f32 %v32, %v112
    %117 = vset.pattern.permute.xlu0 0
    %118 = vperm.xlu0 %117, %v104
    %v119 = vpop.permute.xlu0 %118
    %v121 = vunpack.c.l.s4 839922192
    %v122 = vunpack.c.0.s8 %v121
    %v123 = vperm.slane %v119, %v122
    %v125 = vadd.f32 %v114, %v123
    %v126 = vadd.f32 %v115, %v123
    %127 = vst [vmem:[#allocation5] sm:$0xff] %v125
    %128 = vst [vmem:[#allocation5 + $0x8] sm:$0xff] %v126
    // Predicated region
    $region18: #{tpu_custom_call.1} parent=1 // pred_check
      _
    $region19: #{tpu_custom_call.1} parent=1 // pred_check_branch
      %130 = sbr.rel (0) target = $region21
    $region20: #{tpu_custom_call.1} parent=1 // pred_region
      %132 = vsyncadd [#allocation4], 0
      %s133 = sshll.u32 [#allocation5], 4
      %s134 = int_to_ptr.vmem [resolvable:$true] %s133
      %s135 = sshll.u32 %s3, 4
      %s136 = int_to_ptr.hbm [resolvable:$true] %s135
      %141 = dma.vmem_to_hbm [thread:$0]  %s134, 256, %s136, [#allocation4], 128, 128, 8
    $region21: #{tpu_custom_call.1} parent=1 // pred_fallthru
      _
    // Predicated region
    $region22: #{tpu_custom_call.1} parent=1 // pred_check
      _
    $region23: #{tpu_custom_call.1} parent=1 // pred_check_branch
      %143 = sbr.rel (0) target = $region25
    $region24: #{tpu_custom_call.1} parent=1 // pred_region
      %145 = dma.done [#allocation4], 256
    $region25: #{tpu_custom_call.1} parent=1 // pred_fallthru
      _
    %146 = vsyncpa [#allocation3], 1
    %147 = vsyncpa [#allocation4], 1

</llo_original>
